<compile_context>
chip_gen: v6e
topology: v6e:2x2x1
jax: 0.10.0
libtpu: 0.0.40
codegen_flags: <defaults>
</compile_context>

<pallas_src>
import functools

import jax
import jax.numpy as jnp
from jax import lax
from jax.experimental import pallas as pl
from jax.experimental.pallas import tpu as pltpu

LN_EPS = 1e-5  # torch.nn.LayerNorm default eps


def _round_up(n: int, m: int) -> int:
    return ((n + m - 1) // m) * m


def _tpu_vmem_capacity_bytes() -> int:
    try:
        return int(pltpu.get_tpu_info().vmem_capacity_bytes)
    except Exception:
        return 128 * 1024 * 1024  # conservative default (v5e/v6e)


def _const_block_spec(block_shape, index_map):
    """Grid-invariant operand: fetched once, so single-buffer it to save VMEM."""
    try:
        return pl.BlockSpec(block_shape, index_map, pipeline_mode=pl.Buffered(1))
    except TypeError:  # older BlockSpec without pipeline_mode kwarg
        return pl.BlockSpec(block_shape, index_map)


def _select_batch_tile(B: int, prefer_split: bool) -> int:
    """Pick the batch tile: single tile for small B, else minimize padding waste."""
    if B <= 256:
        return _round_up(max(B, 8), 8)
    best_tm, best_key = None, None
    for tm in (512, 256, 128):
        b_pad = _round_up(B, tm)
        ntiles = b_pad // tm
        waste = b_pad - B
        split_penalty = 0 if (not prefer_split or ntiles >= 2) else 1
        key = (waste, split_penalty, -tm)
        if best_key is None or key < best_key:
            best_key, best_tm = key, tm
    return best_tm


def _select_k_tile(H: int) -> int:
    best_tk, best_key = None, None
    for tk in (512, 256, 128):
        key = (_round_up(H, tk) - H, -tk)
        if best_key is None or key < best_key:
            best_key, best_tk = key, tk
    return best_tk


def _layernorm_lastdim(y, true_t: int, t_pad: int):
    """LayerNorm (no affine) over the last axis; true width true_t <= t_pad.

    Padded columns of y are exactly zero (zero weight columns + zero bias), so
    the mean over the true columns equals sum(y)/true_t.  The variance is the
    exact two-pass centered form with padded columns masked out — non-negative
    by construction, so rsqrt(var + eps) is always finite.
    """
    inv_t = 1.0 / float(true_t)
    mean = jnp.sum(y, axis=-1, keepdims=True) * inv_t
    centered = y - mean
    if t_pad != true_t:
        col = lax.broadcasted_iota(jnp.int32, y.shape, dimension=y.ndim - 1)
        centered = jnp.where(col < true_t, centered, 0.0)
    var = jnp.sum(centered * centered, axis=-1, keepdims=True) * inv_t
    return centered * lax.rsqrt(var + LN_EPS)


def _head_kernel(x_ref, w_ref, b_ref, o_ref, *, true_t: int, t_pad: int):
    """Fused Linear + LayerNorm, full hidden dim resident.

    x_ref: (tm, H)      bf16 embeddings block
    w_ref: (H, T_pad)   bf16 weight (transposed layout, zero-padded cols)
    b_ref: (1, T_pad)   f32 bias (zero-padded cols)
    o_ref: (tm, T_pad)  output block (padded cols are 0, sliced on host)
    """
    y = jnp.dot(x_ref[...], w_ref[...], preferred_element_type=jnp.float32)
    y = y + b_ref[...].astype(jnp.float32)
    o_ref[...] = _layernorm_lastdim(y, true_t, t_pad).astype(o_ref.dtype)


def _head_kernel_ktiled(x_ref, w_ref, b_ref, o_ref, acc_ref, *,
                        true_t: int, t_pad: int):
    """K-tiled variant: hidden dim split over the last ('arbitrary') grid axis."""
    k = pl.program_id(1)

    @pl.when(k == 0)
    def _():
        acc_ref[...] = jnp.zeros_like(acc_ref)

    acc_ref[...] += jnp.dot(x_ref[...], w_ref[...],
                            preferred_element_type=jnp.float32)

    @pl.when(k == pl.num_programs(1) - 1)
    def _():
        y = acc_ref[...] + b_ref[...].astype(jnp.float32)
        o_ref[...] = _layernorm_lastdim(y, true_t, t_pad).astype(o_ref.dtype)


def mfbert_head(x, weight_t, bias, *, out_dtype=jnp.float32,
                force_k_tiles: bool = False, tk=None):
    """MFBERT head: LayerNorm(W_0 @ x + b), no affine.

    x:        [B, H] float embeddings (transformer output).
    weight_t: [H, T] linear weight stored transposed vs PyTorch's [T, H].
    bias:     [T]    linear bias.
    Returns [B, T] `out_dtype`.
    """
    B, H = x.shape
    H2, T = weight_t.shape
    assert H == H2, (H, H2)
    assert bias.shape == (T,)

    T_pad = _round_up(T, 128)  # lane-dense output stores / full MXU N
    out_itemsize = jnp.dtype(out_dtype).itemsize

    vmem_cap = _tpu_vmem_capacity_bytes()
    vmem_budget = int(vmem_cap * 0.75)           # leave compiler headroom
    is_v7x_like = vmem_cap <= 64 * 1024 * 1024   # 2-TC generations: 64 MiB/TC

    tm_eff = _select_batch_tile(B, prefer_split=is_v7x_like)
    B_pad = _round_up(B, tm_eff)

    def _footprint(tm, kh, n_w_buf):
        # x (bf16, double-buffered) + weight + bias + output (double-buffered)
        return (2 * tm * kh * 2 + n_w_buf * kh * T_pad * 2 + T_pad * 4
                + 2 * tm * T_pad * out_itemsize)

    flat_need = _footprint(tm_eff, H, n_w_buf=2)
    use_k_tiles = force_k_tiles or (flat_need > vmem_budget // 2)

    if use_k_tiles:
        tk_eff = int(tk) if tk is not None else _select_k_tile(H)
        H_pad = _round_up(H, tk_eff)
    else:
        tk_eff = H
        H_pad = H

    # Pad + bf16 cast (fuses into one HBM pass with the kernel when jitted).
    x_p = x
    if B_pad != B or H_pad != H:
        x_p = jnp.pad(x, ((0, B_pad - B), (0, H_pad - H)))
    w_p = weight_t
    if H_pad != H or T_pad != T:
        w_p = jnp.pad(weight_t, ((0, H_pad - H), (0, T_pad - T)))
    b_p = bias if T_pad == T else jnp.pad(bias, (0, T_pad - T))
    x_bf = x_p.astype(jnp.bfloat16)
    w_bf = w_p.astype(jnp.bfloat16)
    b2d = b_p.astype(jnp.float32).reshape(1, T_pad)

    cost = pl.CostEstimate(
        flops=2 * B_pad * H_pad * T_pad,
        transcendentals=0,
        bytes_accessed=(B_pad * H_pad * 2 + H_pad * T_pad * 2 + T_pad * 4
                        + B_pad * T_pad * out_itemsize),
    )

    if use_k_tiles:
        grid = (B_pad // tm_eff, H_pad // tk_eff)
        kernel = functools.partial(_head_kernel_ktiled, true_t=T, t_pad=T_pad)
        in_specs = [
            pl.BlockSpec((tm_eff, tk_eff), lambda i, k: (i, k)),   # x block
            pl.BlockSpec((tk_eff, T_pad), lambda i, k: (k, 0)),    # weight K-tile
            _const_block_spec((1, T_pad), lambda i, k: (0, 0)),    # bias
        ]
        out_specs = pl.BlockSpec((tm_eff, T_pad), lambda i, k: (i, 0))
        scratch_shapes = [pltpu.VMEM((tm_eff, T_pad), jnp.float32)]
        dims = ("parallel", "arbitrary")
        vmem_need = _footprint(tm_eff, tk_eff, n_w_buf=2) + tm_eff * T_pad * 4
    else:
        grid = (B_pad // tm_eff,)
        kernel = functools.partial(_head_kernel, true_t=T, t_pad=T_pad)
        in_specs = [
            pl.BlockSpec((tm_eff, H_pad), lambda i: (i, 0)),        # x block
            _const_block_spec((H_pad, T_pad), lambda i: (0, 0)),    # full weight
            _const_block_spec((1, T_pad), lambda i: (0, 0)),        # bias
        ]
        out_specs = pl.BlockSpec((tm_eff, T_pad), lambda i: (i, 0))
        scratch_shapes = []
        dims = ("parallel",)
        vmem_need = _footprint(tm_eff, H_pad, n_w_buf=2)

    vmem_limit = None
    if vmem_need > 16 * 1024 * 1024:
        vmem_limit = min(_round_up(int(vmem_need * 1.5), 1 << 20), vmem_budget)

    out_p = pl.pallas_call(
        kernel,
        out_shape=jax.ShapeDtypeStruct((B_pad, T_pad), out_dtype),
        grid_spec=pltpu.PrefetchScalarGridSpec(
            num_scalar_prefetch=0,
            grid=grid,
            in_specs=in_specs,
            out_specs=out_specs,
            scratch_shapes=scratch_shapes,
        ),
        compiler_params=pltpu.CompilerParams(
            dimension_semantics=dims,
            vmem_limit_bytes=vmem_limit,
        ),
        cost_estimate=cost,
    )(x_bf, w_bf, b2d)

    return out_p[:B, :T]


def reference(x, weight_t, bias):
    y = jnp.dot(x, weight_t, precision=lax.Precision.HIGHEST) + bias
    mean = y.mean(-1, keepdims=True)
    var = ((y - mean) ** 2).mean(-1, keepdims=True)
    return (y - mean) / jnp.sqrt(var + LN_EPS)


if __name__ == "__main__":
    # Small shapes consistent with the module (transformer embedding -> head).
    # batch and num_targets deliberately NOT multiples of 8/128 to exercise the
    # padding / lane-masked statistics paths.
    batch = 10
    hidden_dim = 256
    num_targets = 100

    key = jax.random.PRNGKey(0)
    kx, kw, kb = jax.random.split(key, 3)

    # "Transformer output" embeddings (stand-in for MFBERT output).
    x = jax.random.normal(kx, (batch, hidden_dim), dtype=jnp.float32)

    # W_0: kaiming_normal_(mode='fan_in', nonlinearity='linear') => std=1/sqrt(fan_in).
    # Stored transposed: [hidden_dim, num_targets].
    w_std = 1.0 / jnp.sqrt(jnp.float32(hidden_dim))
    weight_t = w_std * jax.random.normal(
        kw, (hidden_dim, num_targets), dtype=jnp.float32)
    # Linear bias default init: uniform(-1/sqrt(fan_in), 1/sqrt(fan_in)).
    bound = 1.0 / jnp.sqrt(jnp.float32(hidden_dim))
    bias = jax.random.uniform(
        kb, (num_targets,), minval=-bound, maxval=bound, dtype=jnp.float32)

    # Reference evaluated on the same bf16-rounded operands the MXU sees.
    x_r = x.astype(jnp.bfloat16).astype(jnp.float32)
    w_r = weight_t.astype(jnp.bfloat16).astype(jnp.float32)
    ref = reference(x_r, w_r, bias)

    # Default path: single batch tile, full hidden dim resident.
    fwd = jax.jit(mfbert_head)
    out = fwd(x, weight_t, bias)
    jax.block_until_ready(out)
    assert out.shape == (batch, num_targets)
    assert bool(jnp.all(jnp.isfinite(out)))
    assert jnp.allclose(out, ref, atol=2e-3, rtol=2e-3)

    # K-tiled accumulator path (auto-selected for BERT-sized heads that would
    # not fit resident in VMEM, e.g. on v7x); forced here to validate it.
    fwd_k = jax.jit(functools.partial(mfbert_head, force_k_tiles=True, tk=128))
    out_k = fwd_k(x, weight_t, bias)
    jax.block_until_ready(out_k)
    assert out_k.shape == (batch, num_targets)
    assert bool(jnp.all(jnp.isfinite(out_k)))
    assert jnp.allclose(out_k, ref, atol=2e-3, rtol=2e-3)

    print("KERNEL_OK")
</pallas_src>

<mosaic_0001>
module attributes {stable_mosaic.version = 11 : i64} {
  func.func @_head_kernel(%arg0: i32, %arg1: memref<16x256xbf16, #tpu.memory_space<vmem>>, %arg2: memref<256x128xbf16, #tpu.memory_space<vmem>>, %arg3: memref<1x128xf32, #tpu.memory_space<vmem>>, %arg4: memref<16x128xf32, #tpu.memory_space<vmem>>) attributes {dimension_semantics = [#tpu.dimension_semantics<parallel>], iteration_bounds = array<i64: 1>, scalar_prefetch = 0 : i64, scratch_operands = 0 : i64, tpu.core_type = #tpu.core_type<tc>, window_params = [{transform_indices = @transform_0, window_bounds = array<i64: 16, 256>}, {pipeline_mode = #tpu.pipeline_mode<synchronous>, transform_indices = @transform_1, window_bounds = array<i64: 256, 128>}, {pipeline_mode = #tpu.pipeline_mode<synchronous>, transform_indices = @transform_2, window_bounds = array<i64: 1, 128>}, {transform_indices = @transform_3, window_bounds = array<i64: 16, 128>}]} {
    %c0 = arith.constant 0 : index
    %c0_0 = arith.constant 0 : index
    %0 = vector.load %arg1[%c0, %c0_0] : memref<16x256xbf16, #tpu.memory_space<vmem>>, vector<16x256xbf16>
    %c0_1 = arith.constant 0 : index
    %c0_2 = arith.constant 0 : index
    %1 = vector.load %arg2[%c0_1, %c0_2] : memref<256x128xbf16, #tpu.memory_space<vmem>>, vector<256x128xbf16>
    %cst = arith.constant dense<0.000000e+00> : vector<16x128xf32>
    %2 = tpu.matmul %0, %1, %cst {dimension_numbers = #tpu.dot_dimension_numbers<[1], [0], [0], [1], [0, 0, 1, 1], [], []>} : vector<16x256xbf16>, vector<256x128xbf16>, vector<16x128xf32> -> vector<16x128xf32>
    %c0_3 = arith.constant 0 : index
    %c0_4 = arith.constant 0 : index
    %3 = vector.load %arg3[%c0_3, %c0_4] : memref<1x128xf32, #tpu.memory_space<vmem>>, vector<1x128xf32>
    %4 = vector.broadcast %3 : vector<1x128xf32> to vector<16x128xf32>
    %5 = arith.addf %2, %4 : vector<16x128xf32>
    %cst_5 = arith.constant dense<0.000000e+00> : vector<16xf32>
    %6 = vector.multi_reduction <add>, %5, %cst_5 [1] : vector<16x128xf32> to vector<16xf32>
    %7 = vector.shape_cast %6 : vector<16xf32> to vector<16x1xf32>
    %cst_6 = arith.constant 0.00999999977 : f32
    %8 = vector.broadcast %cst_6 : f32 to vector<16x1xf32>
    %9 = arith.mulf %7, %8 : vector<16x1xf32>
    %10 = vector.broadcast %9 : vector<16x1xf32> to vector<16x128xf32>
    %11 = arith.subf %5, %10 : vector<16x128xf32>
    %12 = tpu.iota {dimensions = array<i32: 1>} : vector<16x128xi32>
    %c100_i32 = arith.constant 100 : i32
    %13 = vector.broadcast %c100_i32 : i32 to vector<16x128xi32>
    %14 = arith.cmpi slt, %12, %13 : vector<16x128xi32>
    %cst_7 = arith.constant 0.000000e+00 : f32
    %15 = vector.broadcast %cst_7 : f32 to vector<16x128xf32>
    %16 = arith.select %14, %11, %15 : vector<16x128xi1>, vector<16x128xf32>
    %17 = arith.mulf %16, %16 : vector<16x128xf32>
    %cst_8 = arith.constant dense<0.000000e+00> : vector<16xf32>
    %18 = vector.multi_reduction <add>, %17, %cst_8 [1] : vector<16x128xf32> to vector<16xf32>
    %19 = vector.shape_cast %18 : vector<16xf32> to vector<16x1xf32>
    %cst_9 = arith.constant 0.00999999977 : f32
    %20 = vector.broadcast %cst_9 : f32 to vector<16x1xf32>
    %21 = arith.mulf %19, %20 : vector<16x1xf32>
    %cst_10 = arith.constant 9.99999974E-6 : f32
    %22 = vector.broadcast %cst_10 : f32 to vector<16x1xf32>
    %23 = arith.addf %21, %22 : vector<16x1xf32>
    %24 = math.rsqrt %23 : vector<16x1xf32>
    %25 = vector.broadcast %24 : vector<16x1xf32> to vector<16x128xf32>
    %26 = arith.mulf %16, %25 : vector<16x128xf32>
    %c0_11 = arith.constant 0 : index
    %c0_12 = arith.constant 0 : index
    %27 = vector.load %arg4[%c0_11, %c0_12] : memref<16x128xf32, #tpu.memory_space<vmem>>, vector<16x128xf32>
    tpu.vector_store %arg4[%c0_11, %c0_12], %26 {strides = array<i32>} : memref<16x128xf32, #tpu.memory_space<vmem>>, vector<16x128xf32>,
    return
  }
  func.func @transform_0(%arg0: i32) -> (i32, i32) {
    %c0_i32 = arith.constant 0 : i32
    %c0_i32_0 = arith.constant 0 : i32
    return %arg0, %c0_i32 : i32, i32
  }
  func.func @transform_1(%arg0: i32) -> (i32, i32) {
    %c0_i32 = arith.constant 0 : i32
    %c0_i32_0 = arith.constant 0 : i32
    %c0_i32_1 = arith.constant 0 : i32
    return %c0_i32, %c0_i32_0 : i32, i32
  }
  func.func @transform_2(%arg0: i32) -> (i32, i32) {
    %c0_i32 = arith.constant 0 : i32
    %c0_i32_0 = arith.constant 0 : i32
    %c0_i32_1 = arith.constant 0 : i32
    return %c0_i32, %c0_i32_0 : i32, i32
  }
  func.func @transform_3(%arg0: i32) -> (i32, i32) {
    %c0_i32 = arith.constant 0 : i32
    %c0_i32_0 = arith.constant 0 : i32
    return %arg0, %c0_i32 : i32, i32
  }
}

</mosaic_0001>

<llo_original>
// kernel: mfbert_head.1
$region0: #{mfbert_head.1}
  #allocation0 [shape = 'u32[]', space=smem, size = 0x4, offset = 0x4, fixed_abs, tag = 'smem constant byte address 0x4 - core index']
  #allocation1 [shape = 'u32[144,128]{1,0:T(1,128)}', space=vmem, size = 0x12000, scoped, tag = 'internal scratch']
  %s0 = inlined_call_operand.vmem [shape: bf16[16,256], index: 0, kind: input, shape index: {}]
  %s1 = inlined_call_operand.vmem [shape: bf16[256,128], index: 1, kind: input, shape index: {}]
  %s2 = inlined_call_operand.vmem [shape: f32[1,128], index: 2, kind: input, shape index: {}]
  %s3 = inlined_call_operand.hbm [shape: f32[16,128], index: 3, kind: output, shape index: {}]
  %s4 = sld [smem:[#allocation0]]
  $region22: #{mfbert_head.1} parent=0
    _
  %s6 = ssub.s32 1, %s4
  %s7 = scalar_select 0, %s6, %s4
  $region1: #{mfbert_head.1} parent=0
    #allocation2 [shape = 'u8[8192]{0}', space=vmem, size = 0x2000, scoped, tag = 'output window, operand 0, single buffered']
    #allocation3 [shape = 's32[1]{0}', space=sflag, size = 0x4, scoped, tag = 'scoped memory for mfbert_head.1']
    %8 = vsyncpa [#allocation3], 0
    // Predicated region
    $region2: #{mfbert_head.1} parent=1 // pred_check
      _
    $region3: #{mfbert_head.1} parent=1 // pred_check_branch
      %10 = sbr.rel (0) target = $region5
    $region4: #{mfbert_head.1} parent=1 // pred_region
      _
    $region5: #{mfbert_head.1} parent=1 // pred_fallthru
      _
    // Predicated region
    $region6: #{mfbert_head.1} parent=1 // pred_check
      _
    $region7: #{mfbert_head.1} parent=1 // pred_check_branch
      %12 = sbr.rel (0) target = $region9
    $region8: #{mfbert_head.1} parent=1 // pred_region
      _
    $region9: #{mfbert_head.1} parent=1 // pred_fallthru
      _
    // Predicated region
    $region10: #{mfbert_head.1} parent=1 // pred_check
      _
    $region11: #{mfbert_head.1} parent=1 // pred_check_branch
      %14 = sbr.rel (0) target = $region13
    $region12: #{mfbert_head.1} parent=1 // pred_region
      _
    $region13: #{mfbert_head.1} parent=1 // pred_fallthru
      _
    %v16 = vld [vmem:[%s0] sm:$0xff]
    %v17 = vld [vmem:[%s0 + $0x8] sm:$0xff]
    %v18 = vld [vmem:[%s1] sm:$0xf]
    %v19 = vld [vmem:[%s1 + $0x4] sm:$0xf]
    %v20 = vld [vmem:[%s1 + $0x8] sm:$0xf]
    %v21 = vld [vmem:[%s1 + $0xc] sm:$0xf]
    %v22 = vld [vmem:[%s1 + $0x10] sm:$0xf]
    %v23 = vld [vmem:[%s1 + $0x14] sm:$0xf]
    %v24 = vld [vmem:[%s1 + $0x18] sm:$0xf]
    %v25 = vld [vmem:[%s1 + $0x1c] sm:$0xf]
    %v26 = vld [vmem:[%s1 + $0x20] sm:$0xf]
    %v27 = vld [vmem:[%s1 + $0x24] sm:$0xf]
    %v28 = vld [vmem:[%s1 + $0x28] sm:$0xf]
    %v29 = vld [vmem:[%s1 + $0x2c] sm:$0xf]
    %v30 = vld [vmem:[%s1 + $0x30] sm:$0xf]
    %v31 = vld [vmem:[%s1 + $0x34] sm:$0xf]
    %v32 = vld [vmem:[%s1 + $0x38] sm:$0xf]
    %v33 = vld [vmem:[%s1 + $0x3c] sm:$0xf]
    %v34 = vld [vmem:[%s1 + $0x40] sm:$0xf]
    %v35 = vld [vmem:[%s1 + $0x44] sm:$0xf]
    %v36 = vld [vmem:[%s1 + $0x48] sm:$0xf]
    %v37 = vld [vmem:[%s1 + $0x4c] sm:$0xf]
    %v38 = vld [vmem:[%s1 + $0x50] sm:$0xf]
    %v39 = vld [vmem:[%s1 + $0x54] sm:$0xf]
    %v40 = vld [vmem:[%s1 + $0x58] sm:$0xf]
    %v41 = vld [vmem:[%s1 + $0x5c] sm:$0xf]
    %v42 = vld [vmem:[%s1 + $0x60] sm:$0xf]
    %v43 = vld [vmem:[%s1 + $0x64] sm:$0xf]
    %v44 = vld [vmem:[%s1 + $0x68] sm:$0xf]
    %v45 = vld [vmem:[%s1 + $0x6c] sm:$0xf]
    %v46 = vld [vmem:[%s1 + $0x70] sm:$0xf]
    %v47 = vld [vmem:[%s1 + $0x74] sm:$0xf]
    %v48 = vld [vmem:[%s1 + $0x78] sm:$0xf]
    %v49 = vld [vmem:[%s1 + $0x7c] sm:$0xf]
    %v50 = vld [vmem:[%s2] sm:$0x1]
    %v52 = vlaneseq
    %v53 = vshrl.u32 %v52, 7
    %v54 = vsub.s32 0, %v53
    %v55 = vrot.slane %v50, %v54
    %v59 = vunpack.c.l.b16 %v16
    %v60 = vunpack.c.h.b16 %v16
    %v61 = vunpack.c.l.b16 %v17
    %v62 = vunpack.c.h.b16 %v17
    %v63 = vpack.c.b16 %v61, %v59
    %v64 = vpack.c.b16 %v62, %v60
    %v99 = vunpack.c.l.b16 %v18
    %v100 = vunpack.c.l.b16 %v19
    %v101 = vunpack.c.l.b16 %v20
    %v102 = vunpack.c.l.b16 %v21
    %v103 = vunpack.c.l.b16 %v22
    %v104 = vunpack.c.l.b16 %v23
    %v105 = vunpack.c.l.b16 %v24
    %v106 = vunpack.c.l.b16 %v25
    %v107 = vunpack.c.l.b16 %v26
    %v108 = vunpack.c.l.b16 %v27
    %v109 = vunpack.c.l.b16 %v28
    %v110 = vunpack.c.l.b16 %v29
    %v111 = vunpack.c.l.b16 %v30
    %v112 = vunpack.c.l.b16 %v31
    %v113 = vunpack.c.l.b16 %v32
    %v114 = vunpack.c.l.b16 %v33
    %v115 = vunpack.c.l.b16 %v34
    %v116 = vunpack.c.l.b16 %v35
    %v117 = vunpack.c.l.b16 %v36
    %v118 = vunpack.c.l.b16 %v37
    %v119 = vunpack.c.l.b16 %v38
    %v120 = vunpack.c.l.b16 %v39
    %v121 = vunpack.c.l.b16 %v40
    %v122 = vunpack.c.l.b16 %v41
    %v123 = vunpack.c.l.b16 %v42
    %v124 = vunpack.c.l.b16 %v43
    %v125 = vunpack.c.l.b16 %v44
    %v126 = vunpack.c.l.b16 %v45
    %v127 = vunpack.c.l.b16 %v46
    %v128 = vunpack.c.l.b16 %v47
    %v129 = vunpack.c.l.b16 %v48
    %v130 = vunpack.c.l.b16 %v49
    %v131 = vpack.c.b16 %v100, %v99
    %v132 = vpack.c.b16 %v102, %v101
    %v133 = vpack.c.b16 %v104, %v103
    %v134 = vpack.c.b16 %v106, %v105
    %v135 = vpack.c.b16 %v108, %v107
    %v136 = vpack.c.b16 %v110, %v109
    %v137 = vpack.c.b16 %v112, %v111
    %v138 = vpack.c.b16 %v114, %v113
    %v139 = vpack.c.b16 %v116, %v115
    %v140 = vpack.c.b16 %v118, %v117
    %v141 = vpack.c.b16 %v120, %v119
    %v142 = vpack.c.b16 %v122, %v121
    %v143 = vpack.c.b16 %v124, %v123
    %v144 = vpack.c.b16 %v126, %v125
    %v145 = vpack.c.b16 %v128, %v127
    %v146 = vpack.c.b16 %v130, %v129
    %163 = vmatprep.subr.bf16.mxu0 0
    %164 = vmatpush1.bf16.msra.mxu0 %v138
    %165 = vmatprep.subr.bf16.mxu0 0
    %166 = vmatpush1.bf16.msra.mxu0 %v137
    %167 = vmatprep.subr.bf16.mxu0 0
    %168 = vmatpush1.bf16.msra.mxu0 %v136
    %169 = vmatprep.subr.bf16.mxu0 0
    %170 = vmatpush1.bf16.msra.mxu0 %v135
    %171 = vmatprep.subr.bf16.mxu0 0
    %172 = vmatpush1.bf16.msra.mxu0 %v134
    %173 = vmatprep.subr.bf16.mxu0 0
    %174 = vmatpush1.bf16.msra.mxu0 %v133
    %175 = vmatprep.subr.bf16.mxu0 0
    %176 = vmatpush1.bf16.msra.mxu0 %v132
    %177 = vmatprep.subr.bf16.mxu0 0
    %178 = vmatpush1.bf16.msra.mxu0 %v131
    %179 = vmatprep.subr.bf16.mxu0 0
    %180 = vmatpush2.bf16.msra.mxu0 %v146
    %181 = vmatprep.subr.bf16.mxu0 0
    %182 = vmatpush2.bf16.msra.mxu0 %v145
    %183 = vmatprep.subr.bf16.mxu0 0
    %184 = vmatpush2.bf16.msra.mxu0 %v144
    %185 = vmatprep.subr.bf16.mxu0 0
    %186 = vmatpush2.bf16.msra.mxu0 %v143
    %187 = vmatprep.subr.bf16.mxu0 0
    %188 = vmatpush2.bf16.msra.mxu0 %v142
    %189 = vmatprep.subr.bf16.mxu0 0
    %190 = vmatpush2.bf16.msra.mxu0 %v141
    %191 = vmatprep.subr.bf16.mxu0 0
    %192 = vmatpush2.bf16.msra.mxu0 %v140
    %193 = vmatprep.subr.bf16.mxu0 0
    %194 = vmatpush2.bf16.msra.mxu0 %v139
    %195 = vmatprep.mubr.bf16.mxu0 %v64
    %196 = vmatmul.mubr.bf16.gmra.mxu0 %v63
    %v197 = vpop.f32.mrf.mxu0
    %v198 = vadd.f32 %v55, %v197
    %v199 = vpop.f32.mrf.mxu0
    %v200 = vpop.f32.mrf.mxu0
    %v201 = vadd.f32 %v55, %v200
    %v202 = vpop.f32.mrf.mxu0
    %203 = vdwg.mxu0
    %204 = vadd.xlane.f32.xlu0 %v198
    %v205 = vpop.xlane.xlu0 %204
    %206 = vadd.xlane.f32.xlu0 %v201
    %v207 = vpop.xlane.xlu0 %206
    %v208 = vmul.f32 %v205, 0.01
    %v209 = vmul.f32 %v207, 0.01
    %v210 = vsub.f32 %v198, %v208
    %v211 = vsub.f32 %v201, %v209
    %v212 = vlaneseq
    %v213 = vand.u32 %v212, 127
    %vm214 = vcmp.lt.s32.totalorder %v213, 100
    %v215 = vsel %vm214, %v210, 0.0
    %v216 = vsel %vm214, %v211, 0.0
    %v217 = vmul.f32 %v215, %v215
    %v218 = vmul.f32 %v216, %v216
    %219 = vadd.xlane.f32.xlu0 %v217
    %v220 = vpop.xlane.xlu0 %219
    %221 = vadd.xlane.f32.xlu0 %v218
    %v222 = vpop.xlane.xlu0 %221
    %v223 = vmul.f32 %v220, 0.01
    %v224 = vmul.f32 %v222, 0.01
    %v225 = vadd.f32 %v223, 1e-05
    %v226 = vadd.f32 %v224, 1e-05
    %v227 = vrsqrt.pop %v225
    %v228 = vrsqrt.pop %v226
    %v229 = vmul.f32 %v215, %v227
    %v230 = vmul.f32 %v216, %v228
    %231 = vst [vmem:[#allocation2] sm:$0xff] %v229
    %232 = vst [vmem:[#allocation2 + $0x8] sm:$0xff] %v230
    // Predicated region
    $region14: #{mfbert_head.1} parent=1 // pred_check
      _
    $region15: #{mfbert_head.1} parent=1 // pred_check_branch
      %234 = sbr.rel (0) target = $region17
    $region16: #{mfbert_head.1} parent=1 // pred_region
      %s236 = ssub.s32 256, 256
      %237 = vsyncadd [#allocation3], %s236
      %s238 = sshll.u32 [#allocation2], 4
      %s239 = int_to_ptr.vmem [resolvable:$true] %s238
      %244 = dma.vmem_to_hbm [thread:$0]  %s239, 256, %s3, [#allocation3], 128, 128, 8
    $region17: #{mfbert_head.1} parent=1 // pred_fallthru
      _
    // Predicated region
    $region18: #{mfbert_head.1} parent=1 // pred_check
      _
    $region19: #{mfbert_head.1} parent=1 // pred_check_branch
      %246 = sbr.rel (0) target = $region21
    $region20: #{mfbert_head.1} parent=1 // pred_region
      %247 = dma.done [#allocation3], 256
    $region21: #{mfbert_head.1} parent=1 // pred_fallthru
      _
    %248 = vsyncpa [#allocation3], 1

</llo_original>
